<compile_context>
chip_gen: v6e
topology: v6e:2x2x1
jax: 0.10.0
libtpu: 0.0.40
codegen_flags: <defaults>
</compile_context>

<pallas_src>
import functools

import jax
import jax.numpy as jnp
from jax.experimental import pallas as pl
from jax.experimental.pallas import tpu as pltpu


def _round_up(x, m):
    return ((x + m - 1) // m) * m


def _is_v7x():
    try:
        kind = jax.devices()[0].device_kind.lower()
    except Exception:
        return False
    return "v7" in kind or "7x" in kind


def merge_layer_kernel(x_ref, w1_ref, b1_ref, w2_ref, b2_ref, o_ref):
    # fc1: MXU matmul with f32 accumulation; bias + ReLU epilogue in f32.
    h = jnp.dot(x_ref[...], w1_ref[...], preferred_element_type=jnp.float32)
    h = jnp.maximum(h + b1_ref[...], 0.0)
    # fc2: cast activations back to the weight compute dtype for the MXU.
    out = jnp.dot(h.astype(w2_ref.dtype), w2_ref[...],
                  preferred_element_type=jnp.float32)
    o_ref[...] = (out + b2_ref[...]).astype(o_ref.dtype)


def prepare_merge_params(w1, b1, w2, b2, compute_dtype=jnp.bfloat16):
    """One-time parameter preprocessing (transpose / pad / cast).

    w1: [d3, d1+d2], b1: [d3], w2: [d4, d3], b2: [d4]  (PyTorch Linear layout).
    Returns ((w1_t, b1_2d, w2_t_pad, b2_2d_pad), d4).
    """
    d3, _ = w1.shape
    d4, _ = w2.shape
    d4_pad = _round_up(d4, 128)  # lane-dense output columns

    w1_t = jnp.transpose(w1).astype(compute_dtype)               # [d1+d2, d3]
    w2_t = jnp.zeros((d3, d4_pad), compute_dtype)
    w2_t = w2_t.at[:, :d4].set(jnp.transpose(w2).astype(compute_dtype))
    b1_2d = b1.reshape(1, d3).astype(jnp.float32)
    b2_2d = jnp.zeros((1, d4_pad), jnp.float32).at[:, :d4].set(
        b2.astype(jnp.float32))
    return (w1_t, b1_2d, w2_t, b2_2d), d4


def _choose_tile_b(B, din, d4_pad, in_itemsize):
    # v7x: 64 MiB VMEM per TC -> roughly half the batch tile of v5e/v6e.
    cap = 256 if _is_v7x() else 512
    tile = min(_round_up(B, 8), cap)
    budget = 8 << 20  # double-buffered activation-tile budget (fits v5e scope)

    def act_bytes(t):
        return 2 * t * din * in_itemsize + 2 * t * d4_pad * 4

    while tile > 8 and act_bytes(tile) > budget:
        tile //= 2
    return max(_round_up(tile, 8), 8)


@functools.partial(jax.jit, static_argnums=(6,))
def _merge_forward(x1, x2, w1_t, b1, w2_t, b2, d4):
    B = x1.shape[0]
    din = x1.shape[1] + x2.shape[1]
    d3 = w1_t.shape[1]
    d4_pad = w2_t.shape[1]
    compute_dtype = w1_t.dtype
    in_itemsize = jnp.dtype(compute_dtype).itemsize

    # Fold the concat here (single small-K matmul inside the kernel).
    x = jnp.concatenate([x1, x2], axis=1).astype(compute_dtype)

    tile_b = _choose_tile_b(B, din, d4_pad, in_itemsize)
    grid = (pl.cdiv(B, tile_b),)

    # Explicit VMEM budget: double-buffered activation tiles + weights/biases.
    act_bytes = 2 * tile_b * din * in_itemsize + 2 * tile_b * d4_pad * 4
    wgt_bytes = 2 * ((w1_t.size + w2_t.size) * in_itemsize
                     + (b1.size + b2.size) * 4)
    vmem_limit = int(min(act_bytes + wgt_bytes + (4 << 20), 64 << 20))

    cost = pl.CostEstimate(
        flops=2 * B * din * d3 + 2 * B * d3 * d4_pad,
        transcendentals=0,
        bytes_accessed=(x.size * in_itemsize
                        + (w1_t.size + w2_t.size) * in_itemsize
                        + (b1.size + b2.size) * 4
                        + B * d4_pad * 4),
    )

    out = pl.pallas_call(
        merge_layer_kernel,
        out_shape=jax.ShapeDtypeStruct((B, d4_pad), jnp.float32),
        grid_spec=pltpu.PrefetchScalarGridSpec(
            num_scalar_prefetch=0,
            grid=grid,
            in_specs=[
                pl.BlockSpec((tile_b, din), lambda i: (i, 0)),   # x: batch-tiled
                pl.BlockSpec((din, d3), lambda i: (0, 0)),       # w1: resident
                pl.BlockSpec((1, d3), lambda i: (0, 0)),         # b1: resident
                pl.BlockSpec((d3, d4_pad), lambda i: (0, 0)),    # w2: resident
                pl.BlockSpec((1, d4_pad), lambda i: (0, 0)),     # b2: resident
            ],
            out_specs=pl.BlockSpec((tile_b, d4_pad), lambda i: (i, 0)),
        ),
        compiler_params=pltpu.CompilerParams(
            dimension_semantics=("parallel",),
            vmem_limit_bytes=vmem_limit,
        ),
        cost_estimate=cost,
    )(x, w1_t, b1, w2_t, b2)

    return out[:, :d4]  # strip the lane-padding on fc2's output dim


def merge_layer_apply(x1, x2, params):
    (w1_t, b1, w2_t, b2), d4 = params
    return _merge_forward(x1, x2, w1_t, b1, w2_t, b2, d4)


def _xavier_normal(key, out_f, in_f):
    std = (2.0 / (in_f + out_f)) ** 0.5
    return std * jax.random.normal(key, (out_f, in_f), dtype=jnp.float32)


def _linear_bias(key, in_f, out_f):
    # PyTorch Linear default bias init: U(-1/sqrt(fan_in), 1/sqrt(fan_in))
    bound = 1.0 / (in_f ** 0.5)
    return jax.random.uniform(key, (out_f,), minval=-bound, maxval=bound,
                              dtype=jnp.float32)


if __name__ == "__main__":
    # Small shapes consistent with MergeLayer(dim1, dim2, dim3, dim4).
    B, dim1, dim2, dim3, dim4 = 8, 16, 16, 32, 8

    key = jax.random.PRNGKey(0)
    k_x1, k_x2, k_w1, k_b1, k_w2, k_b2 = jax.random.split(key, 6)

    x1 = jax.random.normal(k_x1, (B, dim1), dtype=jnp.float32)
    x2 = jax.random.normal(k_x2, (B, dim2), dtype=jnp.float32)

    w1 = _xavier_normal(k_w1, dim3, dim1 + dim2)   # fc1.weight [d3, d1+d2]
    b1 = _linear_bias(k_b1, dim1 + dim2, dim3)     # fc1.bias   [d3]
    w2 = _xavier_normal(k_w2, dim4, dim3)          # fc2.weight [d4, d3]
    b2 = _linear_bias(k_b2, dim3, dim4)            # fc2.bias   [d4]

    # Reference (same math as the PyTorch forward), in f32.
    x_cat = jnp.concatenate([x1, x2], axis=1)
    ref = jnp.maximum(x_cat @ w1.T + b1, 0.0) @ w2.T + b2

    # f32 compute path: exact semantics check.
    params_f32 = prepare_merge_params(w1, b1, w2, b2, compute_dtype=jnp.float32)
    out_f32 = merge_layer_apply(x1, x2, params_f32)
    jax.block_until_ready(out_f32)
    assert out_f32.shape == (B, dim4)
    assert jnp.allclose(out_f32, ref, atol=1e-5, rtol=1e-5)

    # bf16 compute path (perf configuration): loosened tolerance for bf16 MXU
    # inputs with f32 accumulation.
    params_bf16 = prepare_merge_params(w1, b1, w2, b2, compute_dtype=jnp.bfloat16)
    out_bf16 = merge_layer_apply(x1, x2, params_bf16)
    jax.block_until_ready(out_bf16)
    assert out_bf16.shape == (B, dim4)
    assert jnp.allclose(out_bf16, ref, atol=5e-2, rtol=5e-2)

    print("KERNEL_OK")
</pallas_src>

<mosaic_0001>
module attributes {stable_mosaic.version = 11 : i64} {
  func.func @merge_layer_kernel(%arg0: i32, %arg1: memref<8x32xf32, #tpu.memory_space<vmem>>, %arg2: memref<32x32xf32, #tpu.memory_space<vmem>>, %arg3: memref<1x32xf32, #tpu.memory_space<vmem>>, %arg4: memref<32x128xf32, #tpu.memory_space<vmem>>, %arg5: memref<1x128xf32, #tpu.memory_space<vmem>>, %arg6: memref<8x128xf32, #tpu.memory_space<vmem>>) attributes {dimension_semantics = [#tpu.dimension_semantics<parallel>], iteration_bounds = array<i64: 1>, scalar_prefetch = 0 : i64, scratch_operands = 0 : i64, tpu.core_type = #tpu.core_type<tc>, window_params = [{transform_indices = @transform_0, window_bounds = array<i64: 8, 32>}, {pipeline_mode = #tpu.pipeline_mode<synchronous>, transform_indices = @transform_1, window_bounds = array<i64: 32, 32>}, {pipeline_mode = #tpu.pipeline_mode<synchronous>, transform_indices = @transform_2, window_bounds = array<i64: 1, 32>}, {pipeline_mode = #tpu.pipeline_mode<synchronous>, transform_indices = @transform_3, window_bounds = array<i64: 32, 128>}, {pipeline_mode = #tpu.pipeline_mode<synchronous>, transform_indices = @transform_4, window_bounds = array<i64: 1, 128>}, {transform_indices = @transform_5, window_bounds = array<i64: 8, 128>}]} {
    %c0 = arith.constant 0 : index
    %c0_0 = arith.constant 0 : index
    %0 = vector.load %arg1[%c0, %c0_0] : memref<8x32xf32, #tpu.memory_space<vmem>>, vector<8x32xf32>
    %c0_1 = arith.constant 0 : index
    %c0_2 = arith.constant 0 : index
    %1 = vector.load %arg2[%c0_1, %c0_2] : memref<32x32xf32, #tpu.memory_space<vmem>>, vector<32x32xf32>
    %cst = arith.constant dense<0.000000e+00> : vector<8x32xf32>
    %2 = tpu.matmul %0, %1, %cst {dimension_numbers = #tpu.dot_dimension_numbers<[1], [0], [0], [1], [0, 0, 1, 1], [], []>} : vector<8x32xf32>, vector<32x32xf32>, vector<8x32xf32> -> vector<8x32xf32>
    %c0_3 = arith.constant 0 : index
    %c0_4 = arith.constant 0 : index
    %3 = vector.load %arg3[%c0_3, %c0_4] : memref<1x32xf32, #tpu.memory_space<vmem>>, vector<1x32xf32>
    %4 = vector.broadcast %3 : vector<1x32xf32> to vector<8x32xf32>
    %5 = arith.addf %2, %4 : vector<8x32xf32>
    %cst_5 = arith.constant 0.000000e+00 : f32
    %6 = vector.broadcast %cst_5 : f32 to vector<8x32xf32>
    %7 = arith.maximumf %5, %6 : vector<8x32xf32>
    %c0_6 = arith.constant 0 : index
    %c0_7 = arith.constant 0 : index
    %8 = vector.load %arg4[%c0_6, %c0_7] : memref<32x128xf32, #tpu.memory_space<vmem>>, vector<32x128xf32>
    %cst_8 = arith.constant dense<0.000000e+00> : vector<8x128xf32>
    %9 = tpu.matmul %7, %8, %cst_8 {dimension_numbers = #tpu.dot_dimension_numbers<[1], [0], [0], [1], [0, 0, 1, 1], [], []>} : vector<8x32xf32>, vector<32x128xf32>, vector<8x128xf32> -> vector<8x128xf32>
    %c0_9 = arith.constant 0 : index
    %c0_10 = arith.constant 0 : index
    %10 = vector.load %arg5[%c0_9, %c0_10] : memref<1x128xf32, #tpu.memory_space<vmem>>, vector<1x128xf32>
    %11 = vector.broadcast %10 : vector<1x128xf32> to vector<8x128xf32>
    %12 = arith.addf %9, %11 : vector<8x128xf32>
    %c0_11 = arith.constant 0 : index
    %c0_12 = arith.constant 0 : index
    %13 = vector.load %arg6[%c0_11, %c0_12] : memref<8x128xf32, #tpu.memory_space<vmem>>, vector<8x128xf32>
    tpu.vector_store %arg6[%c0_11, %c0_12], %12 {strides = array<i32>} : memref<8x128xf32, #tpu.memory_space<vmem>>, vector<8x128xf32>,
    return
  }
  func.func @transform_0(%arg0: i32) -> (i32, i32) {
    %c0_i32 = arith.constant 0 : i32
    %c0_i32_0 = arith.constant 0 : i32
    return %arg0, %c0_i32 : i32, i32
  }
  func.func @transform_1(%arg0: i32) -> (i32, i32) {
    %c0_i32 = arith.constant 0 : i32
    %c0_i32_0 = arith.constant 0 : i32
    %c0_i32_1 = arith.constant 0 : i32
    return %c0_i32, %c0_i32_0 : i32, i32
  }
  func.func @transform_2(%arg0: i32) -> (i32, i32) {
    %c0_i32 = arith.constant 0 : i32
    %c0_i32_0 = arith.constant 0 : i32
    %c0_i32_1 = arith.constant 0 : i32
    return %c0_i32, %c0_i32_0 : i32, i32
  }
  func.func @transform_3(%arg0: i32) -> (i32, i32) {
    %c0_i32 = arith.constant 0 : i32
    %c0_i32_0 = arith.constant 0 : i32
    %c0_i32_1 = arith.constant 0 : i32
    return %c0_i32, %c0_i32_0 : i32, i32
  }
  func.func @transform_4(%arg0: i32) -> (i32, i32) {
    %c0_i32 = arith.constant 0 : i32
    %c0_i32_0 = arith.constant 0 : i32
    %c0_i32_1 = arith.constant 0 : i32
    return %c0_i32, %c0_i32_0 : i32, i32
  }
  func.func @transform_5(%arg0: i32) -> (i32, i32) {
    %c0_i32 = arith.constant 0 : i32
    %c0_i32_0 = arith.constant 0 : i32
    return %arg0, %c0_i32 : i32, i32
  }
}

</mosaic_0001>

<llo_original>
// kernel: _merge_forward.1
$region0: #{_merge_forward.1}
  #allocation0 [shape = 'u32[]', space=smem, size = 0x4, offset = 0x4, fixed_abs, tag = 'smem constant byte address 0x4 - core index']
  #allocation1 [shape = 'u32[144,128]{1,0:T(1,128)}', space=vmem, size = 0x12000, scoped, tag = 'internal scratch']
  %s0 = inlined_call_operand.vmem [shape: f32[8,32], index: 0, kind: input, shape index: {}]
  %s1 = inlined_call_operand.hbm [shape: f32[32,32], index: 1, kind: input, shape index: {}]
  %s2 = inlined_call_operand.vmem [shape: f32[1,32], index: 2, kind: input, shape index: {}]
  %s3 = inlined_call_operand.hbm [shape: f32[32,128], index: 3, kind: input, shape index: {}]
  %s4 = inlined_call_operand.vmem [shape: f32[1,128], index: 4, kind: input, shape index: {}]
  %s5 = inlined_call_operand.hbm [shape: f32[8,128], index: 5, kind: output, shape index: {}]
  %s6 = sld [smem:[#allocation0]]
  $region38: #{_merge_forward.1} parent=0
    _
  %s8 = ssub.s32 1, %s6
  %s9 = scalar_select 0, %s8, %s6
  $region1: #{_merge_forward.1} parent=0
    #allocation2 [shape = 'u8[16384]{0}', space=vmem, size = 0x4000, scoped, tag = 'input window, operand 1, single buffered']
    #allocation3 [shape = 's32[1]{0}', space=sflag, size = 0x4, scoped, tag = 'scoped memory for _merge_forward.1']
    #allocation4 [shape = 's32[1]{0}', space=sflag, size = 0x4, scoped, tag = 'scoped memory for _merge_forward.1']
    #allocation5 [shape = 'u8[16384]{0}', space=vmem, size = 0x4000, scoped, tag = 'input window, operand 3, single buffered']
    #allocation6 [shape = 's32[1]{0}', space=sflag, size = 0x4, scoped, tag = 'scoped memory for _merge_forward.1']
    #allocation7 [shape = 'u8[4096]{0}', space=vmem, size = 0x1000, scoped, tag = 'output window, operand 0, single buffered']
    %10 = vsyncpa [#allocation3], 0
    %11 = vsyncpa [#allocation6], 0
    %12 = vsyncpa [#allocation4], 0
    // Predicated region
    $region2: #{_merge_forward.1} parent=1 // pred_check
      _
    $region3: #{_merge_forward.1} parent=1 // pred_check_branch
      %14 = sbr.rel (0) target = $region5
    $region4: #{_merge_forward.1} parent=1 // pred_region
      _
    $region5: #{_merge_forward.1} parent=1 // pred_fallthru
      _
    // Predicated region
    $region6: #{_merge_forward.1} parent=1 // pred_check
      _
    $region7: #{_merge_forward.1} parent=1 // pred_check_branch
      %16 = sbr.rel (0) target = $region9
    $region8: #{_merge_forward.1} parent=1 // pred_region
      %s18 = ssub.s32 512, 512
      %19 = vsyncadd [#allocation3], %s18
      %s20 = sshll.u32 [#allocation2], 4
      %s21 = int_to_ptr.vmem [resolvable:$true] %s20
      %26 = dma.hbm_to_vmem [thread:$0]  %s1, 512, %s21, [#allocation3], 128, 128, 8
    $region9: #{_merge_forward.1} parent=1 // pred_fallthru
      _
    // Predicated region
    $region10: #{_merge_forward.1} parent=1 // pred_check
      _
    $region11: #{_merge_forward.1} parent=1 // pred_check_branch
      %28 = sbr.rel (0) target = $region13
    $region12: #{_merge_forward.1} parent=1 // pred_region
      _
    $region13: #{_merge_forward.1} parent=1 // pred_fallthru
      _
    // Predicated region
    $region14: #{_merge_forward.1} parent=1 // pred_check
      _
    $region15: #{_merge_forward.1} parent=1 // pred_check_branch
      %30 = sbr.rel (0) target = $region17
    $region16: #{_merge_forward.1} parent=1 // pred_region
      %s32 = ssub.s32 512, 512
      %33 = vsyncadd [#allocation6], %s32
      %s34 = sshll.u32 [#allocation5], 4
      %s35 = int_to_ptr.vmem [resolvable:$true] %s34
      %40 = dma.hbm_to_vmem [thread:$0]  %s3, 512, %s35, [#allocation6], 128, 128, 8
    $region17: #{_merge_forward.1} parent=1 // pred_fallthru
      _
    // Predicated region
    $region18: #{_merge_forward.1} parent=1 // pred_check
      _
    $region19: #{_merge_forward.1} parent=1 // pred_check_branch
      %42 = sbr.rel (0) target = $region21
    $region20: #{_merge_forward.1} parent=1 // pred_region
      _
    $region21: #{_merge_forward.1} parent=1 // pred_fallthru
      _
    // Predicated region
    $region22: #{_merge_forward.1} parent=1 // pred_check
      _
    $region23: #{_merge_forward.1} parent=1 // pred_check_branch
      %44 = sbr.rel (0) target = $region25
    $region24: #{_merge_forward.1} parent=1 // pred_region
      %45 = dma.done [#allocation3], 512
    $region25: #{_merge_forward.1} parent=1 // pred_fallthru
      _
    // Predicated region
    $region26: #{_merge_forward.1} parent=1 // pred_check
      _
    $region27: #{_merge_forward.1} parent=1 // pred_check_branch
      %47 = sbr.rel (0) target = $region29
    $region28: #{_merge_forward.1} parent=1 // pred_region
      %48 = dma.done [#allocation6], 512
    $region29: #{_merge_forward.1} parent=1 // pred_fallthru
      _
    %v49 = vld [vmem:[%s0] sm:$0xff]
    %v50 = vld [vmem:[#allocation2] sm:$0xff]
    %v51 = vld [vmem:[#allocation2 + $0x8] sm:$0xff]
    %v52 = vld [vmem:[#allocation2 + $0x10] sm:$0xff]
    %v53 = vld [vmem:[#allocation2 + $0x18] sm:$0xff]
    %v54 = vld [vmem:[%s2] sm:$0x1]
    %v56 = vlaneseq
    %v57 = vshrl.u32 %v56, 7
    %v58 = vsub.s32 0, %v57
    %v59 = vrot.slane %v54, %v58
    %vm61 = vcmask 261120
    %v63 = vsel %vm61, %v49, 0
    %65 = vmatprep.subr.mxu0 0.0
    %66 = vmatpush1.msra.mxu0 0.0
    %67 = vmatprep.subr.mxu0 0.0
    %68 = vmatpush1.msra.mxu0 0.0
    %69 = vmatprep.subr.mxu0 0.0
    %70 = vmatpush1.msra.mxu0 0.0
    %71 = vmatprep.subr.mxu0 0.0
    %72 = vmatpush1.msra.mxu0 0.0
    %73 = vmatprep.subr.mxu0 0.0
    %74 = vmatpush1.msra.mxu0 0.0
    %75 = vmatprep.subr.mxu0 0.0
    %76 = vmatpush1.msra.mxu0 0.0
    %77 = vmatprep.subr.mxu0 0.0
    %78 = vmatpush1.msra.mxu0 0.0
    %79 = vmatprep.subr.mxu0 0.0
    %80 = vmatpush1.msra.mxu0 0.0
    %81 = vmatprep.subr.mxu0 0.0
    %82 = vmatpush1.msra.mxu0 0.0
    %83 = vmatprep.subr.mxu0 0.0
    %84 = vmatpush1.msra.mxu0 0.0
    %85 = vmatprep.subr.mxu0 0.0
    %86 = vmatpush1.msra.mxu0 0.0
    %87 = vmatprep.subr.mxu0 0.0
    %88 = vmatpush1.msra.mxu0 0.0
    %89 = vmatprep.subr.mxu0 0.0
    %90 = vmatpush1.msra.mxu0 %v53
    %91 = vmatprep.subr.mxu0 0.0
    %92 = vmatpush1.msra.mxu0 %v52
    %93 = vmatprep.subr.mxu0 0.0
    %94 = vmatpush1.msra.mxu0 %v51
    %95 = vmatprep.subr.mxu0 0.0
    %96 = vmatpush1.msra.mxu0 %v50
    %97 = vmatprep.subr.mxu0 0.0
    %98 = vmatpush2.msra.mxu0 0.0
    %99 = vmatprep.subr.mxu0 0.0
    %100 = vmatpush2.msra.mxu0 0.0
    %101 = vmatprep.subr.mxu0 0.0
    %102 = vmatpush2.msra.mxu0 0.0
    %103 = vmatprep.subr.mxu0 0.0
    %104 = vmatpush2.msra.mxu0 0.0
    %105 = vmatprep.subr.mxu0 0.0
    %106 = vmatpush2.msra.mxu0 0.0
    %107 = vmatprep.subr.mxu0 0.0
    %108 = vmatpush2.msra.mxu0 0.0
    %109 = vmatprep.subr.mxu0 0.0
    %110 = vmatpush2.msra.mxu0 0.0
    %111 = vmatprep.subr.mxu0 0.0
    %112 = vmatpush2.msra.mxu0 0.0
    %113 = vmatprep.subr.mxu0 0.0
    %114 = vmatpush2.msra.mxu0 0.0
    %115 = vmatprep.subr.mxu0 0.0
    %116 = vmatpush2.msra.mxu0 0.0
    %117 = vmatprep.subr.mxu0 0.0
    %118 = vmatpush2.msra.mxu0 0.0
    %119 = vmatprep.subr.mxu0 0.0
    %120 = vmatpush2.msra.mxu0 0.0
    %121 = vmatprep.subr.mxu0 0.0
    %122 = vmatpush2.msra.mxu0 0.0
    %123 = vmatprep.subr.mxu0 0.0
    %124 = vmatpush2.msra.mxu0 0.0
    %125 = vmatprep.subr.mxu0 0.0
    %126 = vmatpush2.msra.mxu0 0.0
    %127 = vmatprep.subr.mxu0 0.0
    %128 = vmatpush2.msra.mxu0 0.0
    %129 = vmatprep.mubr.f32.mxu0 0.0
    %130 = vmatmul.mubr.f32.gmra.mxu0 %v63
    %v131 = vpop.f32.mrf.mxu0
    %v132 = vadd.f32 %v59, %v131
    %v133 = vpop.f32.mrf.mxu0
    %134 = vdwg.mxu0
    %v135 = vmax.f32 %v132, 0.0
    %v136 = vld [vmem:[#allocation5] sm:$0xff]
    %v137 = vld [vmem:[#allocation5 + $0x8] sm:$0xff]
    %v138 = vld [vmem:[#allocation5 + $0x10] sm:$0xff]
    %v139 = vld [vmem:[#allocation5 + $0x18] sm:$0xff]
    %v140 = vld [vmem:[%s4] sm:$0x1]
    %v142 = vlaneseq
    %v143 = vshrl.u32 %v142, 7
    %v144 = vsub.s32 0, %v143
    %v145 = vrot.slane %v140, %v144
    %v148 = vsel %vm61, %v135, 0
    %150 = vmatprep.subr.mxu0 0.0
    %151 = vmatpush1.msra.mxu0 0.0
    %152 = vmatprep.subr.mxu0 0.0
    %153 = vmatpush1.msra.mxu0 0.0
    %154 = vmatprep.subr.mxu0 0.0
    %155 = vmatpush1.msra.mxu0 0.0
    %156 = vmatprep.subr.mxu0 0.0
    %157 = vmatpush1.msra.mxu0 0.0
    %158 = vmatprep.subr.mxu0 0.0
    %159 = vmatpush1.msra.mxu0 0.0
    %160 = vmatprep.subr.mxu0 0.0
    %161 = vmatpush1.msra.mxu0 0.0
    %162 = vmatprep.subr.mxu0 0.0
    %163 = vmatpush1.msra.mxu0 0.0
    %164 = vmatprep.subr.mxu0 0.0
    %165 = vmatpush1.msra.mxu0 0.0
    %166 = vmatprep.subr.mxu0 0.0
    %167 = vmatpush1.msra.mxu0 0.0
    %168 = vmatprep.subr.mxu0 0.0
    %169 = vmatpush1.msra.mxu0 0.0
    %170 = vmatprep.subr.mxu0 0.0
    %171 = vmatpush1.msra.mxu0 0.0
    %172 = vmatprep.subr.mxu0 0.0
    %173 = vmatpush1.msra.mxu0 0.0
    %174 = vmatprep.subr.mxu0 0.0
    %175 = vmatpush1.msra.mxu0 %v139
    %176 = vmatprep.subr.mxu0 0.0
    %177 = vmatpush1.msra.mxu0 %v138
    %178 = vmatprep.subr.mxu0 0.0
    %179 = vmatpush1.msra.mxu0 %v137
    %180 = vmatprep.subr.mxu0 0.0
    %181 = vmatpush1.msra.mxu0 %v136
    %182 = vmatprep.subr.mxu0 0.0
    %183 = vmatpush2.msra.mxu0 0.0
    %184 = vmatprep.subr.mxu0 0.0
    %185 = vmatpush2.msra.mxu0 0.0
    %186 = vmatprep.subr.mxu0 0.0
    %187 = vmatpush2.msra.mxu0 0.0
    %188 = vmatprep.subr.mxu0 0.0
    %189 = vmatpush2.msra.mxu0 0.0
    %190 = vmatprep.subr.mxu0 0.0
    %191 = vmatpush2.msra.mxu0 0.0
    %192 = vmatprep.subr.mxu0 0.0
    %193 = vmatpush2.msra.mxu0 0.0
    %194 = vmatprep.subr.mxu0 0.0
    %195 = vmatpush2.msra.mxu0 0.0
    %196 = vmatprep.subr.mxu0 0.0
    %197 = vmatpush2.msra.mxu0 0.0
    %198 = vmatprep.subr.mxu0 0.0
    %199 = vmatpush2.msra.mxu0 0.0
    %200 = vmatprep.subr.mxu0 0.0
    %201 = vmatpush2.msra.mxu0 0.0
    %202 = vmatprep.subr.mxu0 0.0
    %203 = vmatpush2.msra.mxu0 0.0
    %204 = vmatprep.subr.mxu0 0.0
    %205 = vmatpush2.msra.mxu0 0.0
    %206 = vmatprep.subr.mxu0 0.0
    %207 = vmatpush2.msra.mxu0 0.0
    %208 = vmatprep.subr.mxu0 0.0
    %209 = vmatpush2.msra.mxu0 0.0
    %210 = vmatprep.subr.mxu0 0.0
    %211 = vmatpush2.msra.mxu0 0.0
    %212 = vmatprep.subr.mxu0 0.0
    %213 = vmatpush2.msra.mxu0 0.0
    %214 = vmatprep.mubr.f32.mxu0 0.0
    %215 = vmatmul.mubr.f32.gmra.mxu0 %v148
    %v216 = vpop.f32.mrf.mxu0
    %v217 = vadd.f32 %v145, %v216
    %v218 = vpop.f32.mrf.mxu0
    %219 = vdwg.mxu0
    %220 = vst [vmem:[#allocation7] sm:$0xff] %v217
    // Predicated region
    $region30: #{_merge_forward.1} parent=1 // pred_check
      _
    $region31: #{_merge_forward.1} parent=1 // pred_check_branch
      %222 = sbr.rel (0) target = $region33
    $region32: #{_merge_forward.1} parent=1 // pred_region
      %s224 = ssub.s32 128, 128
      %225 = vsyncadd [#allocation4], %s224
      %s227 = sshll.u32 [#allocation7], 4
      %s228 = int_to_ptr.vmem [resolvable:$true] %s227
      %230 = dma.vmem_to_hbm [thread:$0]  %s228, 128, %s5, [#allocation4]
    $region33: #{_merge_forward.1} parent=1 // pred_fallthru
      _
    // Predicated region
    $region34: #{_merge_forward.1} parent=1 // pred_check
      _
    $region35: #{_merge_forward.1} parent=1 // pred_check_branch
      %232 = sbr.rel (0) target = $region37
    $region36: #{_merge_forward.1} parent=1 // pred_region
      %233 = dma.done [#allocation4], 128
    $region37: #{_merge_forward.1} parent=1 // pred_fallthru
      _
    %234 = vsyncpa [#allocation3], 1
    %235 = vsyncpa [#allocation6], 1
    %236 = vsyncpa [#allocation4], 1

</llo_original>
